<compile_context>
chip_gen: v5e
topology: v5e:2x2
jax: 0.10.0
libtpu: 0.0.40
codegen_flags: <defaults>
</compile_context>

<pallas_src>
import functools

import jax
import jax.numpy as jnp
from jax.experimental import pallas as pl
from jax.experimental.pallas import tpu as pltpu


_OUT_SUB = 8        # sublane extent of each per-part partial-output block
_OUT_LANE = 128     # lane extent of each per-part partial-output block
_VMEM_INPUT_BUDGET = 8 * 1024 * 1024   # target for the double-buffered logits block


def _round_up(x, m):
    return (x + m - 1) // m * m


def _dbb_kernel(cls_ref, logits_ref, out_ref, acc_ref, *, alpha, beta, n_classes):
    t = pl.program_id(1)

    @pl.when(t == 0)
    def _init():
        acc_ref[0] = jnp.float32(0.0)

    x = logits_ref[...].astype(jnp.float32)          # [BT, C]
    bt, c = x.shape

    # Rebuild the class-membership mask in-register from SMEM scalar indices.
    col = jax.lax.broadcasted_iota(jnp.int32, (bt, c), 1)
    mask = col == cls_ref[0]
    for i in range(1, n_classes):
        mask = jnp.logical_or(mask, col == cls_ref[i])

    # Softmax over the class axis (per-row reciprocal instead of full divide).
    row_max = jnp.max(x, axis=-1, keepdims=True)
    e = jnp.exp(x - row_max)
    denom = jnp.sum(e, axis=-1, keepdims=True)
    p = e * pl.reciprocal(denom)
    omp = 1.0 - p

    # probs < rowmax(probs)  <=>  logits < rowmax(logits)  (exp is monotone).
    notmax = (x < row_max).astype(jnp.float32)

    # Single fused select + single reduction (beta on ~mask, -alpha on mask).
    combined = jnp.where(
        mask,
        (-alpha) * x * omp * omp * notmax,   # boundary (masked) classes
        beta * x * p * p,                    # remaining classes
    )
    acc_ref[0] += jnp.sum(combined)

    @pl.when(t == pl.num_programs(1) - 1)
    def _finalize():
        out_ref[...] = jnp.full((_OUT_SUB, _OUT_LANE), acc_ref[0], jnp.float32)


def dynamic_balancing_boundary_criterion(logits, classes, alpha=1.0, beta=1.0,
                                         *, block_rows=8192, num_parts=2):
    """JAX/Pallas equivalent of DynamicBalancingBoundaryCriterion.forward."""
    assert logits.ndim == 2
    B, C = logits.shape
    cls = jnp.asarray(classes, dtype=jnp.int32)
    n_classes = int(cls.shape[0])

    # Row-tile size: cap by the double-buffered VMEM footprint of the logits
    # block (the C axis pads to 128 lanes in VMEM) and by the rows per part.
    lane_c = _round_up(C, 128)
    bytes_per_row = lane_c * 4
    max_bt = max(8, (_VMEM_INPUT_BUDGET // (2 * bytes_per_row)) // 8 * 8)
    rows_per_part = pl.cdiv(B, num_parts)
    bt = min(block_rows, max_bt, _round_up(rows_per_part, 8))
    bt = max(8, (bt // 8) * 8)

    tiles_per_part = pl.cdiv(rows_per_part, bt)
    padded_b = num_parts * tiles_per_part * bt
    if padded_b != B:
        # Zero logit rows contribute exactly zero score -> no in-kernel masking.
        logits = jnp.pad(logits, ((0, padded_b - B), (0, 0)))

    kernel = functools.partial(_dbb_kernel, alpha=float(alpha),
                               beta=float(beta), n_classes=n_classes)

    out = pl.pallas_call(
        kernel,
        out_shape=jax.ShapeDtypeStruct((num_parts * _OUT_SUB, _OUT_LANE), jnp.float32),
        grid_spec=pltpu.PrefetchScalarGridSpec(
            num_scalar_prefetch=1,
            grid=(num_parts, tiles_per_part),
            in_specs=[
                pl.BlockSpec((bt, C),
                             lambda pt, tt, cls_r: (pt * tiles_per_part + tt, 0)),
            ],
            out_specs=pl.BlockSpec((_OUT_SUB, _OUT_LANE),
                                   lambda pt, tt, cls_r: (pt, 0)),
            scratch_shapes=[pltpu.SMEM((1,), jnp.float32)],
        ),
        compiler_params=pltpu.CompilerParams(
            dimension_semantics=("parallel", "arbitrary"),
        ),
    )(cls, logits)

    partials = out.reshape(num_parts, _OUT_SUB, _OUT_LANE)[:, 0, 0]
    return jnp.sum(partials)


def _reference(logits, classes, alpha=1.0, beta=1.0):
    """Pure-JAX mirror of the PyTorch forward (probs-based notmax, as in torch)."""
    logits = logits.astype(jnp.float32)
    probs = jax.nn.softmax(logits, axis=-1)
    B, C = logits.shape
    mask = jnp.zeros((C,), bool).at[jnp.asarray(classes)].set(True)
    mask = jnp.broadcast_to(mask, (B, C))
    notmax = (probs < jnp.max(probs, axis=1, keepdims=True)).astype(jnp.float32)
    score_non = logits * probs ** 2
    score_msk = logits * (1.0 - probs) ** 2 * notmax
    return (beta * jnp.sum(jnp.where(mask, 0.0, score_non))
            - alpha * jnp.sum(jnp.where(mask, score_msk, 0.0)))


if __name__ == "__main__":
    key = jax.random.PRNGKey(0)
    k1, k2 = jax.random.split(key)

    # Case 1: one tile per part; B padded 8 -> 16 across the 2 grid parts.
    B1, C1, classes1 = 8, 16, (2, 5, 11)
    logits1 = jax.random.normal(k1, (B1, C1), jnp.float32) * 2.0
    out1 = jax.block_until_ready(
        dynamic_balancing_boundary_criterion(logits1, classes1, alpha=1.0, beta=1.0))
    ref1 = _reference(logits1, classes1, alpha=1.0, beta=1.0)
    assert jnp.allclose(out1, ref1, rtol=2e-5, atol=1e-4), (out1, ref1)

    # Case 2: multi-tile accumulation over the "arbitrary" axis + row padding.
    B2, C2, classes2 = 40, 12, (0, 5, 9)
    logits2 = jax.random.normal(k2, (B2, C2), jnp.float32) * 1.5
    out2 = jax.block_until_ready(
        dynamic_balancing_boundary_criterion(logits2, classes2, alpha=0.7, beta=1.3,
                                             block_rows=8))
    ref2 = _reference(logits2, classes2, alpha=0.7, beta=1.3)
    assert jnp.allclose(out2, ref2, rtol=2e-5, atol=1e-4), (out2, ref2)

    print("KERNEL_OK")
</pallas_src>

<mosaic_0001>
module attributes {stable_mosaic.version = 11 : i64} {
  func.func @_dbb_kernel(%arg0: i32, %arg1: i32, %arg2: memref<3xi32, #tpu.memory_space<smem>>, %arg3: memref<8x16xf32, #tpu.memory_space<vmem>>, %arg4: memref<8x128xf32, #tpu.memory_space<vmem>>, %arg5: memref<1xf32, #tpu.memory_space<smem>>) attributes {dimension_semantics = [#tpu.dimension_semantics<parallel>, #tpu.dimension_semantics<arbitrary>], iteration_bounds = array<i64: 2, 1>, scalar_prefetch = 1 : i64, scratch_operands = 1 : i64, tpu.core_type = #tpu.core_type<tc>, window_params = [{transform_indices = @transform_0, window_bounds = array<i64: 8, 16>}, {transform_indices = @transform_1, window_bounds = array<i64: 8, 128>}]} {
    %c0_i32 = arith.constant 0 : i32
    %0 = arith.cmpi eq, %arg1, %c0_i32 : i32
    %1 = arith.extui %0 : i1 to i32
    %c0_i32_0 = arith.constant 0 : i32
    %2 = arith.cmpi ne, %1, %c0_i32_0 : i32
    scf.if %2 {
      %cst_12 = arith.constant 0.000000e+00 : f32
      %c0_13 = arith.constant 0 : index
      %52 = memref.load %arg5[%c0_13] : memref<1xf32, #tpu.memory_space<smem>>
      memref.store %cst_12, %arg5[%c0_13] : memref<1xf32, #tpu.memory_space<smem>>
    } else {
    }
    %c0 = arith.constant 0 : index
    %c0_1 = arith.constant 0 : index
    %3 = vector.load %arg3[%c0, %c0_1] : memref<8x16xf32, #tpu.memory_space<vmem>>, vector<8x16xf32>
    %4 = tpu.iota {dimensions = array<i32: 1>} : vector<8x16xi32>
    %c0_2 = arith.constant 0 : index
    %5 = memref.load %arg2[%c0_2] : memref<3xi32, #tpu.memory_space<smem>>
    %6 = vector.broadcast %5 : i32 to vector<8x16xi32>
    %7 = arith.cmpi eq, %4, %6 : vector<8x16xi32>
    %c1 = arith.constant 1 : index
    %8 = memref.load %arg2[%c1] : memref<3xi32, #tpu.memory_space<smem>>
    %9 = vector.broadcast %8 : i32 to vector<8x16xi32>
    %10 = arith.cmpi eq, %4, %9 : vector<8x16xi32>
    %11 = arith.ori %7, %10 : vector<8x16xi1>
    %c2 = arith.constant 2 : index
    %12 = memref.load %arg2[%c2] : memref<3xi32, #tpu.memory_space<smem>>
    %13 = vector.broadcast %12 : i32 to vector<8x16xi32>
    %14 = arith.cmpi eq, %4, %13 : vector<8x16xi32>
    %15 = arith.ori %11, %14 : vector<8x16xi1>
    %cst = arith.constant dense<0xFF800000> : vector<8xf32>
    %16 = vector.multi_reduction <maximumf>, %3, %cst [1] : vector<8x16xf32> to vector<8xf32>
    %17 = vector.shape_cast %16 : vector<8xf32> to vector<8x1xf32>
    %18 = vector.broadcast %17 : vector<8x1xf32> to vector<8x16xf32>
    %19 = arith.subf %3, %18 : vector<8x16xf32>
    %20 = math.exp %19 : vector<8x16xf32>
    %cst_3 = arith.constant dense<0.000000e+00> : vector<8xf32>
    %21 = vector.multi_reduction <add>, %20, %cst_3 [1] : vector<8x16xf32> to vector<8xf32>
    %22 = vector.shape_cast %21 : vector<8xf32> to vector<8x1xf32>
    %23 = tpu.reciprocal %22 : vector<8x1xf32> -> vector<8x1xf32>
    %24 = vector.broadcast %23 : vector<8x1xf32> to vector<8x16xf32>
    %25 = arith.mulf %20, %24 : vector<8x16xf32>
    %cst_4 = arith.constant 1.000000e+00 : f32
    %26 = vector.broadcast %cst_4 : f32 to vector<8x16xf32>
    %27 = arith.subf %26, %25 : vector<8x16xf32>
    %28 = vector.broadcast %17 : vector<8x1xf32> to vector<8x16xf32>
    %29 = arith.cmpf olt, %3, %28 : vector<8x16xf32>
    %30 = arith.extui %29 : vector<8x16xi1> to vector<8x16xi32>
    %31 = arith.sitofp %30 : vector<8x16xi32> to vector<8x16xf32>
    %cst_5 = arith.constant -1.000000e+00 : f32
    %32 = vector.broadcast %cst_5 : f32 to vector<8x16xf32>
    %33 = arith.mulf %32, %3 : vector<8x16xf32>
    %34 = arith.mulf %33, %27 : vector<8x16xf32>
    %35 = arith.mulf %34, %27 : vector<8x16xf32>
    %36 = arith.mulf %35, %31 : vector<8x16xf32>
    %cst_6 = arith.constant 1.000000e+00 : f32
    %37 = vector.broadcast %cst_6 : f32 to vector<8x16xf32>
    %38 = arith.mulf %37, %3 : vector<8x16xf32>
    %39 = arith.mulf %38, %25 : vector<8x16xf32>
    %40 = arith.mulf %39, %25 : vector<8x16xf32>
    %41 = arith.select %15, %36, %40 : vector<8x16xi1>, vector<8x16xf32>
    %c0_7 = arith.constant 0 : index
    %42 = memref.load %arg5[%c0_7] : memref<1xf32, #tpu.memory_space<smem>>
    %43 = vector.shape_cast %41 : vector<8x16xf32> to vector<1x8x16xf32>
    %cst_8 = arith.constant dense<0.000000e+00> : vector<1xf32>
    %44 = vector.multi_reduction <add>, %43, %cst_8 [1, 2] : vector<1x8x16xf32> to vector<1xf32>
    %45 = vector.shape_cast %44 : vector<1xf32> to vector<1x1x1xf32>
    %46 = vector.extract %45[0, 0, 0] : f32 from vector<1x1x1xf32>
    %47 = arith.addf %42, %46 : f32
    %c0_9 = arith.constant 0 : index
    %48 = memref.load %arg5[%c0_9] : memref<1xf32, #tpu.memory_space<smem>>
    memref.store %47, %arg5[%c0_9] : memref<1xf32, #tpu.memory_space<smem>>
    %c0_i32_10 = arith.constant 0 : i32
    %49 = arith.cmpi eq, %arg1, %c0_i32_10 : i32
    %50 = arith.extui %49 : i1 to i32
    %c0_i32_11 = arith.constant 0 : i32
    %51 = arith.cmpi ne, %50, %c0_i32_11 : i32
    scf.if %51 {
      %c0_12 = arith.constant 0 : index
      %52 = memref.load %arg5[%c0_12] : memref<1xf32, #tpu.memory_space<smem>>
      %53 = vector.broadcast %52 : f32 to vector<8x128xf32>
      %c0_13 = arith.constant 0 : index
      %c0_14 = arith.constant 0 : index
      %54 = vector.load %arg4[%c0_13, %c0_14] : memref<8x128xf32, #tpu.memory_space<vmem>>, vector<8x128xf32>
      tpu.vector_store %arg4[%c0_13, %c0_14], %53 {strides = array<i32>} : memref<8x128xf32, #tpu.memory_space<vmem>>, vector<8x128xf32>,
    } else {
    }
    return
  }
  func.func @transform_0(%arg0: i32, %arg1: i32, %arg2: memref<3xi32, #tpu.memory_space<smem>>) -> (i32, i32) {
    %c1_i32 = arith.constant 1 : i32
    %0 = arith.muli %arg0, %c1_i32 : i32
    %1 = arith.addi %0, %arg1 : i32
    %c0_i32 = arith.constant 0 : i32
    %c0_i32_0 = arith.constant 0 : i32
    return %1, %c0_i32 : i32, i32
  }
  func.func @transform_1(%arg0: i32, %arg1: i32, %arg2: memref<3xi32, #tpu.memory_space<smem>>) -> (i32, i32) {
    %c0_i32 = arith.constant 0 : i32
    %c0_i32_0 = arith.constant 0 : i32
    return %arg0, %c0_i32 : i32, i32
  }
}

</mosaic_0001>

<llo_original>
// kernel: tpu_custom_call.1
$region0: #{tpu_custom_call.1}
  #allocation0 [shape = 'u32[]', space=smem, size = 0x4, offset = 0x4, fixed_abs, tag = 'smem constant byte address 0x4 - core index']
  #allocation1 [shape = 'u32[72,128]{1,0:T(1,128)}', space=vmem, size = 0x9000, scoped, tag = 'internal scratch']
  #allocation2 [shape = 'f32[1]{0:T(128)}', space=smem, size = 0x200, scoped, tag = 'scratch operand']
  #allocation3 [shape = 's32[1]{0}', space=sflag, size = 0x4, scoped, tag = 'scoped memory for tpu_custom_call.1']
  #allocation4 [shape = 'u8[512]{0}', space=smem, size = 0x200, scoped, tag = 'prefetched SMEM operand 0']
  %s0 = inlined_call_operand.hbm [shape: s32[3], index: 0, kind: input, shape index: {}]
  %s1 = inlined_call_operand.hbm [shape: f32[16,16], index: 1, kind: input, shape index: {}]
  %s2 = inlined_call_operand.hbm [shape: f32[16,128], index: 2, kind: output, shape index: {}]
  %s3 = sld [smem:[#allocation0]]
  $region49: #{tpu_custom_call.1} parent=0
    _
  %s5 = ssub.s32 1, %s3
  %s6 = scalar_select 0, %s5, %s3
  %s8 = sshll.u32 %s0, 4
  %s9 = int_to_ptr.hbm [resolvable:$true] %s8
  %11 = dma.hbm_to_smem %s9, 16, [#allocation4], [#allocation3]
  %13 = dma.done [#allocation3], 16
  %14 = sfence
  $region1: #{tpu_custom_call.1} parent=0
    #allocation5 [shape = 'u8[8192]{0}', space=vmem, size = 0x2000, scoped, tag = 'input window, operand 1']
    #allocation6 [shape = 's32[2]{0}', space=sflag, size = 0x8, scoped, tag = 'scoped memory for tpu_custom_call.1']
    #allocation7 [shape = 's32[2]{0}', space=sflag, size = 0x8, scoped, tag = 'scoped memory for tpu_custom_call.1']
    #allocation8 [shape = 'u8[8192]{0}', space=vmem, size = 0x2000, scoped, tag = 'output window, operand 0']
    %15 = vsyncpa [#allocation6], 0
    %s16 = scalar_lea.sflag [#allocation6], 1
    %17 = vsyncpa %s16, 0
    %18 = vsyncpa [#allocation7], 0
    %s19 = scalar_lea.sflag [#allocation7], 1
    %20 = vsyncpa %s19, 0
    loop: start=0, step=1, limit=4
    $region2: #{tpu_custom_call.1} parent=1 // loop_pre_header
      _
    $region3: #{tpu_custom_call.1} parent=1 // loop_header
      %s22 = sphi 0, %s26
      %p23 = scmp.ge.s32.totalorder %s22, 4
      %s29 = sphi 0, %s41
      %s30 = sphi 0, %s37
      %s31 = sphi 0, %s29
      %s32 = sphi 0, %s30
      %s33 = sphi 0, %s31
      %s34 = sphi 0, %s32
      %s46 = sphi 0, %s48
      %s49 = sphi 0, %s46
      %s50 = sphi 0, %s49
      %s66 = sphi 0, %s50
      %s72 = sphi 0, %s74
      %s75 = sphi 0, %s72
      %s76 = sphi 0, %s75
      %s92 = sphi 0, %s76
    $region4: #{tpu_custom_call.1} parent=1 // loop_header_branch
      %25 = sbr.rel (%p23) target = $region8
    $region5: #{tpu_custom_call.1} parent=1 // loop_body
      %s27 = ssub.s32 %s22, 1
      %s28 = ssub.s32 %s22, 2
      %s35 = sadd.s32 1, %s30
      %p36 = scmp.ge.s32.totalorder %s35, 1
      %s37 = scalar_select %p36, 0, %s35
      %s38 = sadd.s32 1, %s29
      %s39 = scalar_select %p36, %s38, %s29
      %p40 = scmp.ge.s32.totalorder %s39, 2
      %s41 = scalar_select %p40, 0, %s39
      %s42 = sadd.s32 %s29, %s30
      %s43 = sadd.s32 %s41, %s37
      %s44 = ssub.s32 %s42, %s43
      %p45 = scmp.eq.s32.totalorder %s44, 0
      %s47 = sadd.s32 %s46, 1
      %s48 = scalar_select %p45, %s46, %s47
      %p51 = pneg %p45
      %p52 = scmp.eq.s32.totalorder %s22, 1
      %p53 = por %p51, %p52
      %p54 = scmp.ne.s32.totalorder %s46, %s49
      %p55 = scmp.eq.s32.totalorder %s22, 0
      %p56 = por %p54, %p55
      %p57 = scmp.ne.s32.totalorder %s46, %s49
      %p58 = scmp.eq.s32.totalorder %s27, 1
      %p59 = por %p57, %p58
      %p60 = scmp.ne.s32.totalorder %s49, %s50
      %p61 = scmp.eq.s32.totalorder %s27, 0
      %p62 = por %p60, %p61
      %p63 = scmp.ne.s32.totalorder %s49, %s50
      %p64 = scmp.eq.s32.totalorder %s28, 1
      %p65 = por %p63, %p64
      %p67 = scmp.ne.s32.totalorder %s50, %s66
      %p68 = scmp.eq.s32.totalorder %s28, 0
      %p69 = por %p67, %p68
      %s70 = ssub.s32 %s29, %s41
      %p71 = scmp.eq.s32.totalorder %s70, 0
      %s73 = sadd.s32 %s72, 1
      %s74 = scalar_select %p71, %s72, %s73
      %p77 = pneg %p71
      %p78 = scmp.eq.s32.totalorder %s22, 1
      %p79 = por %p77, %p78
      %p80 = scmp.ne.s32.totalorder %s72, %s75
      %p81 = scmp.eq.s32.totalorder %s22, 0
      %p82 = por %p80, %p81
      %p83 = scmp.ne.s32.totalorder %s72, %s75
      %p84 = scmp.eq.s32.totalorder %s27, 1
      %p85 = por %p83, %p84
      %p86 = scmp.ne.s32.totalorder %s75, %s76
      %p87 = scmp.eq.s32.totalorder %s27, 0
      %p88 = por %p86, %p87
      %p89 = scmp.ne.s32.totalorder %s75, %s76
      %p90 = scmp.eq.s32.totalorder %s28, 1
      %p91 = por %p89, %p90
      %p93 = scmp.ne.s32.totalorder %s76, %s92
      %p94 = scmp.eq.s32.totalorder %s28, 0
      %p95 = por %p93, %p94
      %p96 = scmp.le.s32.totalorder 1, %s22
      %p97 = scmp.lt.s32.totalorder %s22, 3
      %p98 = pnand %p96, %p97
      %p99 = pneg %p98
      // Predicated region
      $region9: #{tpu_custom_call.1} parent=5 // pred_check
        _
      $region10: #{tpu_custom_call.1} parent=5 // pred_check_branch
        %101 = sbr.rel (%p98) target = $region12
      $region11: #{tpu_custom_call.1} parent=5 // pred_region
        %s102 = ssub.s32 %s22, 1
      $region12: #{tpu_custom_call.1} parent=5 // pred_fallthru
        _
      %p103 = scmp.lt.s32.totalorder %s22, 2
      // Predicated region
      $region13: #{tpu_custom_call.1} parent=5 // pred_check
        %p104 = pneg %p103
      $region14: #{tpu_custom_call.1} parent=5 // pred_check_branch
        %106 = sbr.rel (%p104) target = $region16
      $region15: #{tpu_custom_call.1} parent=5 // pred_region
        // Predicated region
        $region17: #{tpu_custom_call.1} parent=15 // pred_check
          %p107 = pneg %p56
        $region18: #{tpu_custom_call.1} parent=15 // pred_check_branch
          %109 = sbr.rel (%p107) target = $region20
        $region19: #{tpu_custom_call.1} parent=15 // pred_region
          %s110 = sand.u32 %s46, 1
          %s111 = scalar_lea.sflag [#allocation6], %s110
          %s112 = sand.u32 %s46, 1
          %s113 = smul.addr %s112, 8
          %s114 = scalar_lea.vmem [#allocation5], %s113
          %s115 = sadd.s32 %s29, %s30
          %117 = vsyncadd %s111, 0
          %s118 = smul.addr %s115, 8
          %s119 = scalar_lea.hbm %s1, %s118
          %s121 = sshll.u32 %s119, 4
          %s122 = int_to_ptr.hbm [resolvable:$true] %s121
          %s123 = sshll.u32 %s114, 4
          %s124 = int_to_ptr.vmem [resolvable:$true] %s123
          %126 = dma.hbm_to_vmem [thread:$0]  %s122, 128, %s124, %s111
        $region20: #{tpu_custom_call.1} parent=15 // pred_fallthru
          _
      $region16: #{tpu_custom_call.1} parent=5 // pred_fallthru
        _
      %p127 = scmp.le.s32.totalorder 1, %s22
      %p128 = scmp.lt.s32.totalorder %s22, 3
      %p129 = pnand %p127, %p128
      %p130 = pneg %p129
      // Predicated region
      $region21: #{tpu_custom_call.1} parent=5 // pred_check
        _
      $region22: #{tpu_custom_call.1} parent=5 // pred_check_branch
        %132 = sbr.rel (%p129) target = $region24
      $region23: #{tpu_custom_call.1} parent=5 // pred_region
        %s133 = ssub.s32 %s22, 1
        %s134 = sand.u32 %s49, 1
        %s135 = scalar_lea.sflag [#allocation6], %s134
        %s136 = sand.u32 %s49, 1
        %s137 = smul.addr %s136, 8
        %s138 = scalar_lea.vmem [#allocation5], %s137
        // Predicated region
        $region25: #{tpu_custom_call.1} parent=23 // pred_check
          %p139 = pneg %p62
        $region26: #{tpu_custom_call.1} parent=23 // pred_check_branch
          %141 = sbr.rel (%p139) target = $region28
        $region27: #{tpu_custom_call.1} parent=23 // pred_region
          %143 = dma.done %s135, 128
        $region28: #{tpu_custom_call.1} parent=23 // pred_fallthru
          _
        %s144 = sand.u32 %s49, 1
        %s145 = scalar_lea.sflag [#allocation6], %s144
        %s146 = sand.u32 %s49, 1
        %s147 = smul.addr %s146, 8
        %s148 = scalar_lea.vmem [#allocation5], %s147
        %p149 = pneg %p62
        %p150 = pneg %p59
        %p151 = pneg %p88
        %p152 = pneg %p85
        %s153 = sand.u32 %s75, 1
        %s154 = scalar_lea.sflag [#allocation7], %s153
        %s155 = sand.u32 %s75, 1
        %s156 = smul.addr %s155, 8
        %s157 = scalar_lea.vmem [#allocation8], %s156
        %s158 = sadd.s32 %s31, %s32
        %p159 = scmp.eq.s32.totalorder %s32, 0
        // Predicated region
        $region29: #{tpu_custom_call.1} parent=23 // pred_check
          %p160 = pneg %p159
        $region30: #{tpu_custom_call.1} parent=23 // pred_check_branch
          %162 = sbr.rel (%p160) target = $region32
        $region31: #{tpu_custom_call.1} parent=23 // pred_region
          %s163 = scalar_lea.smem [#allocation2], 0
          %164 = sst [smem:[%s163]] 0.0
        $region32: #{tpu_custom_call.1} parent=23 // pred_fallthru
          _
        %v165 = vld [vmem:[%s138] sm:$0xff]
        %v166 = vlaneseq
        %v167 = vand.u32 %v166, 127
        %s168 = sld [smem:[#allocation4]]
        %v169 = vstv %s168
        %vm170 = vcmp.eq.s32.totalorder %v167, %v169
        %s171 = sld [smem:[#allocation4 + $0x1]]
        %v172 = vstv %s171
        %vm173 = vcmp.eq.s32.totalorder %v167, %v172
        %vm174 = vmor %vm170, %vm173
        %s175 = sld [smem:[#allocation4 + $0x2]]
        %v176 = vstv %s175
        %vm177 = vcmp.eq.s32.totalorder %v167, %v176
        %vm178 = vmor %vm174, %vm177
        %vm179 = vcmask 130048
        %v180 = vsel %vm179, %v165, -inf
        %181 = vmax.xlane.f32.xlu0 %v180
        %v182 = vpop.xlane.xlu0 %181
        %v183 = vsub.f32 %v165, %v182
        %v184 = vmul.f32 %v183, 1.442695
        %v185 = vpow.pop %v184
        %v186 = vsel %vm179, %v185, 0.0
        %187 = vadd.xlane.f32.xlu0 %v186
        %v188 = vpop.xlane.xlu0 %187
        %v189 = vrcp.pop %v188
        %v190 = vmul.f32 %v188, %v189
        %v191 = vsub.f32 1.0, %v190
        %v192 = vmul.f32 %v189, %v191
        %v193 = vadd.f32 %v189, %v192
        %vm194 = vweird.f32 %v188
        %vm195 = vweird.f32 %v189
        %vm196 = vmor %vm194, %vm195
        %v197 = vsel %vm196, %v189, %v193
        %v198 = vand.u32 2147483647, %v188
        %vm199 = vcmp.eq.f32.partialorder %v198, 8.507059e+37
        %v200 = vand.u32 %v188, 2147483648
        %v201 = vor.u32 1.1754944e-38, %v200
        %v202 = vsel %vm199, %v201, %v197
        %v203 = vmul.f32 %v185, %v202
        %v204 = vsub.f32 1.0, %v203
        %vm205 = vcmp.lt.f32.partialorder %v165, %v182
        %v206 = vsel %vm205, 1, 0
        %v207 = vcvt.s32.f32 %v206
        %v208 = vmul.f32 %v165, -1.0
        %v209 = vmul.f32 %v208, %v204
        %v210 = vmul.f32 %v209, %v204
        %v211 = vmul.f32 %v210, %v207
        %v212 = vmul.f32 %v165, %v203
        %v213 = vmul.f32 %v212, %v203
        %v214 = vsel %vm178, %v211, %v213
        %s215 = sld [smem:[#allocation2]]
        %v216 = vsel %vm179, %v214, 0.0
        %217 = vadd.xlane.f32.xlu0 %v216
        %v218 = vpop.xlane.xlu0 %217
        %v219 = vrot.slane %v218, 4
        %v220 = vadd.f32 %v218, %v219
        %v221 = vrot.slane %v220, 2
        %v222 = vadd.f32 %v220, %v221
        %v223 = vrot.slane %v222, 1
        %v224 = vadd.f32 %v222, %v223
        %s225 = vtos %v224
        %s226 = sadd.f32 %s215, %s225
        %s227 = scalar_lea.smem [#allocation2], 0
        %228 = sst [smem:[%s227]] %s226
        // Predicated region
        $region33: #{tpu_custom_call.1} parent=23 // pred_check
          %p229 = pneg %p159
        $region34: #{tpu_custom_call.1} parent=23 // pred_check_branch
          %231 = sbr.rel (%p229) target = $region36
        $region35: #{tpu_custom_call.1} parent=23 // pred_region
          %s232 = sld [smem:[#allocation2]]
          %v233 = vstv %s232
          %234 = vst [vmem:[%s157] sm:$0xff] %v233
        $region36: #{tpu_custom_call.1} parent=23 // pred_fallthru
          _
        %s235 = sand.u32 %s75, 1
        %s236 = scalar_lea.sflag [#allocation7], %s235
        %s237 = sand.u32 %s75, 1
        %s238 = smul.addr %s237, 8
        %s239 = scalar_lea.vmem [#allocation8], %s238
        // Predicated region
        $region37: #{tpu_custom_call.1} parent=23 // pred_check
          %p240 = pneg %p85
        $region38: #{tpu_custom_call.1} parent=23 // pred_check_branch
          %242 = sbr.rel (%p240) target = $region40
        $region39: #{tpu_custom_call.1} parent=23 // pred_region
          %244 = vsyncadd %s236, 0
          %s245 = smul.addr %s31, 8
          %s246 = scalar_lea.hbm %s2, %s245
          %s248 = sshll.u32 %s239, 4
          %s249 = int_to_ptr.vmem [resolvable:$true] %s248
          %s250 = sshll.u32 %s246, 4
          %s251 = int_to_ptr.hbm [resolvable:$true] %s250
          %253 = dma.vmem_to_hbm [thread:$0]  %s249, 128, %s251, %s236
        $region40: #{tpu_custom_call.1} parent=23 // pred_fallthru
          _
      $region24: #{tpu_custom_call.1} parent=5 // pred_fallthru
        _
      %p254 = scmp.le.s32.totalorder 2, %s22
      // Predicated region
      $region41: #{tpu_custom_call.1} parent=5 // pred_check
        %p255 = pneg %p254
      $region42: #{tpu_custom_call.1} parent=5 // pred_check_branch
        %257 = sbr.rel (%p255) target = $region44
      $region43: #{tpu_custom_call.1} parent=5 // pred_region
        %s258 = ssub.s32 %s22, 2
        // Predicated region
        $region45: #{tpu_custom_call.1} parent=43 // pred_check
          %p259 = pneg %p91
        $region46: #{tpu_custom_call.1} parent=43 // pred_check_branch
          %261 = sbr.rel (%p259) target = $region48
        $region47: #{tpu_custom_call.1} parent=43 // pred_region
          %s262 = sand.u32 %s76, 1
          %s263 = scalar_lea.sflag [#allocation7], %s262
          %s264 = sand.u32 %s76, 1
          %s265 = smul.addr %s264, 8
          %s266 = scalar_lea.vmem [#allocation8], %s265
          %268 = dma.done %s263, 128
        $region48: #{tpu_custom_call.1} parent=43 // pred_fallthru
          _
      $region44: #{tpu_custom_call.1} parent=5 // pred_fallthru
        _
    $region6: #{tpu_custom_call.1} parent=1 // loop_footer
      %s26 = sadd.s32 1, %s22
    $region7: #{tpu_custom_call.1} parent=1 // loop_footer_branch
      %21 = sbr.rel target = $region3
    $region8: #{tpu_custom_call.1} parent=1 // loop_exit
      _
    %269 = vsyncpa [#allocation6], 1
    %s270 = scalar_lea.sflag [#allocation6], 1
    %271 = vsyncpa %s270, 1
    %272 = vsyncpa [#allocation7], 1
    %s273 = scalar_lea.sflag [#allocation7], 1
    %274 = vsyncpa %s273, 1

</llo_original>
